<compile_context>
chip_gen: v5e
topology: v5e:2x2
jax: 0.10.0
libtpu: 0.0.40
codegen_flags: <defaults>
</compile_context>

<pallas_src>
import functools

import jax
import jax.numpy as jnp
from jax.experimental import pallas as pl
from jax.experimental.pallas import tpu as pltpu


def _dma_slice_kernel(seq_len, w_hbm, o_hbm, sem):
    """Copy the first `seq_len` rows of the table with one HBM->HBM DMA."""
    cp = pltpu.make_async_copy(w_hbm.at[pl.ds(0, seq_len), :], o_hbm, sem)
    cp.start()
    cp.wait()


@functools.partial(jax.jit, static_argnums=(1,))
def positional_embedding_forward(weight, seq_len):
    """Return weight[:, :seq_len, :] via a single direct HBM->HBM DMA.

    weight: (1, max_len, d_model)
    seq_len: static python int (taken from x.shape[1])
    """
    _, max_len, d_model = weight.shape
    assert 0 < seq_len <= max_len
    dtype = weight.dtype

    # 2-D row-major view; the first seq_len rows are a contiguous byte prefix.
    # No 128-lane / 8-sublane divisibility requirement: both refs stay in HBM.
    w2d = weight.reshape(max_len, d_model)

    out2d = pl.pallas_call(
        functools.partial(_dma_slice_kernel, seq_len),
        out_shape=jax.ShapeDtypeStruct((seq_len, d_model), dtype),
        in_specs=[pl.BlockSpec(memory_space=pl.ANY)],
        out_specs=pl.BlockSpec(memory_space=pl.ANY),
        scratch_shapes=[pltpu.SemaphoreType.DMA(())],
    )(w2d)
    return out2d.reshape(1, seq_len, d_model)


class LearnablePositionalEmbeddingJAX:
    def __init__(self, d_model, max_len=512, key=None):
        if key is None:
            key = jax.random.PRNGKey(0)
        # Synthetic init matching torch's 0.1 * randn(max_len, d_model)
        # (not bit-exact with torch's RNG, same distribution/semantics).
        pe = 0.1 * jax.random.normal(key, (max_len, d_model), dtype=jnp.float32)
        self.weight = pe[None, :, :]  # (1, max_len, d_model)

    def __call__(self, x):
        # x: (batch, seq, feature); only Dim.seq (== 1) is consumed.
        seq_len = x.shape[1]
        return positional_embedding_forward(self.weight, seq_len)


if __name__ == "__main__":
    key = jax.random.PRNGKey(0)
    k_w, k_x = jax.random.split(key)

    d_model = 32
    max_len = 512
    batch, seq = 2, 8

    module = LearnablePositionalEmbeddingJAX(d_model, max_len=max_len, key=k_w)

    # Main case.
    x = jax.random.normal(k_x, (batch, seq, d_model), dtype=jnp.float32)
    out = jax.block_until_ready(module(x))
    ref = module.weight[:, :seq, :]
    assert out.shape == (1, seq, d_model)
    assert jnp.allclose(out, ref)

    # Non-multiple-of-8 / non-128-aligned seq_len: no special path needed now.
    x7 = jax.random.normal(k_x, (batch, 7, d_model), dtype=jnp.float32)
    out7 = jax.block_until_ready(module(x7))
    assert out7.shape == (1, 7, d_model)
    assert jnp.allclose(out7, module.weight[:, :7, :])

    # Odd max_len (previously crashed on the (max_len*d_model)//128 reshape).
    module_odd = LearnablePositionalEmbeddingJAX(d_model, max_len=513, key=k_w)
    out_odd = jax.block_until_ready(module_odd(x))
    assert out_odd.shape == (1, seq, d_model)
    assert jnp.allclose(out_odd, module_odd.weight[:, :seq, :])

    print("KERNEL_OK")
</pallas_src>

<mosaic_0001>
module attributes {stable_mosaic.version = 11 : i64} {
  func.func @_dma_slice_kernel(%arg0: memref<512x32xf32, #tpu.memory_space<any>>, %arg1: memref<8x32xf32, #tpu.memory_space<any>>, %arg2: memref<!tpu.dma_semaphore, #tpu.memory_space<semaphore_mem>>) attributes {dimension_semantics = [], scalar_prefetch = 0 : i64, scratch_operands = 1 : i64, tpu.core_type = #tpu.core_type<tc>} {
    %c0_i32 = arith.constant 0 : i32
    %c0_i32_0 = arith.constant 0 : i32
    %0 = tpu.memref_slice %arg0[%c0_i32, %c0_i32_0] : memref<512x32xf32, #tpu.memory_space<any>> -> memref<8x32xf32, #tpu.memory_space<any>>
    tpu.enqueue_dma source(%0 : memref<8x32xf32, #tpu.memory_space<any>>) target(%arg1 : memref<8x32xf32, #tpu.memory_space<any>>) target_semaphore(%arg2 : memref<!tpu.dma_semaphore, #tpu.memory_space<semaphore_mem>>)
    %c0_i32_1 = arith.constant 0 : i32
    %c0_i32_2 = arith.constant 0 : i32
    %1 = tpu.memref_slice %arg0[%c0_i32_1, %c0_i32_2] : memref<512x32xf32, #tpu.memory_space<any>> -> memref<8x32xf32, #tpu.memory_space<any>>
    tpu.wait_dma2 semaphore(%arg2 : memref<!tpu.dma_semaphore, #tpu.memory_space<semaphore_mem>>) src(%1 : memref<8x32xf32, #tpu.memory_space<any>>) dst(%arg1 : memref<8x32xf32, #tpu.memory_space<any>>)
    return
  }
}

</mosaic_0001>

<llo_original>
// kernel: positional_embedding_forward.1
$region0: #{positional_embedding_forward.1}
  #allocation0 [shape = 'u32[]', space=smem, size = 0x4, offset = 0x4, fixed_abs, tag = 'smem constant byte address 0x4 - core index']
  #allocation1 [shape = 'u32[72,128]{1,0:T(1,128)}', space=vmem, size = 0x9000, scoped, tag = 'internal scratch']
  #allocation2 [shape = 's32[1]{0}', space=sflag, size = 0x4, scoped, tag = 'scratch operand']
  #allocation3 [shape = 's32[]', space=sflag, size = 0x4, offset = 0, fixed_abs, tag = 'sflag constant byte address 0x0 - dummy sync flag']
  #allocation4 [shape = 's32[]', space=sflag, size = 0x4, offset = 0, fixed_abs, tag = 'sflag constant byte address 0x0 - dummy sync flag']
  #allocation5 [shape = 'u32[]', space=smem, size = 0x4, offset = 0x44, fixed_abs, tag = 'smem constant byte address 0x44 - assertion arg 0']
  #allocation6 [shape = 'u32[]', space=smem, size = 0x4, offset = 0x48, fixed_abs, tag = 'smem constant byte address 0x48 - assertion arg 1']
  %s0 = inlined_call_operand.vmem [shape: f32[512,32], index: 0, kind: input, shape index: {}]
  %s1 = inlined_call_operand.hbm [shape: f32[8,32], index: 1, kind: output, shape index: {}]
  %s2 = sld [smem:[#allocation0]]
  $region6: #{positional_embedding_forward.1} parent=0
    _
  %s4 = ssub.s32 1, %s2
  %s5 = scalar_select 0, %s4, %s2
  // Predicated region
  $region2: #{positional_embedding_forward.1} parent=0 // pred_check
    _
  $region3: #{positional_embedding_forward.1} parent=0 // pred_check_branch
    %7 = sbr.rel target = $region5
  $region4: #{positional_embedding_forward.1} parent=0 // pred_region
    %8 = sst [smem:[#allocation5]] [#allocation4]
    %9 = sst [smem:[#allocation6]] [#allocation3]
  $region5: #{positional_embedding_forward.1} parent=0 // pred_fallthru
    _
  %11 = shalt.err (0)
  %s13 = sshll.u32 %s0, 4
  %s14 = int_to_ptr.vmem [resolvable:$true] %s13
  %s15 = sshll.u32 %s1, 4
  %s16 = int_to_ptr.hbm [resolvable:$true] %s15
  %18 = dma.vmem_to_hbm [thread:$0]  %s14, 128, %s16, [#allocation2]
  %s19 = smul.u32 8, 1
  %s20 = sshll.u32 %s19, 4
  %21 = dma.done [#allocation2], %s20
  %22 = vsyncmov [#allocation2]
  %s23 = vpop.sfrf %22
  %p24 = scmp.eq.s32.totalorder %s23, 0
  %p25 = pneg %p24
  %27 = shalt.err (%p25)

</llo_original>
